<compile_context>
chip_gen: v5e
topology: v5e:2x2
jax: 0.10.0
libtpu: 0.0.40
codegen_flags: <defaults>
</compile_context>

<pallas_src>
import functools

import jax
import jax.numpy as jnp
from jax.experimental import pallas as pl
from jax.experimental.pallas import tpu as pltpu

EPS = 1e-5


# --------------------------------------------------------------------------
# Fused kernel: BN(scale/shift) -> ReLU -> 2x2 avg-pool (matmul) -> 1x1 conv
# --------------------------------------------------------------------------
def transition_kernel(x_ref, scale_ref, shift_ref, pool_ref, w_ref, o_ref):
    """x_ref:     (1, Cin, L)   native-NCHW chunk (L = spatial elements)
    scale_ref:   (Cin, 1) f32   folded BN scale (gamma * rsqrt(var+eps))
    shift_ref:   (Cin, 1) f32   folded BN shift (beta - mean*scale)
    pool_ref:    (L, L//4)      pooling matrix, 0.25 entries (mxu dtype)
    w_ref:       (Cout, Cin)    1x1 conv weight (mxu dtype)
    o_ref:       (1, Cout, L//4)
    """
    # BN affine + ReLU in f32, lane-dense (spatial on lanes, channels on
    # sublanes); (Cin,1) scale/shift broadcast along lanes.
    y = jnp.maximum(x_ref[0] * scale_ref[...] + shift_ref[...], 0.0)
    # 2x2 average pool as a matmul with the constant 0.25 selection matrix
    # (keeps everything lane-dense; no lane gathers / strided slices needed).
    pooled = jnp.dot(y.astype(pool_ref.dtype), pool_ref[...],
                     preferred_element_type=jnp.float32)
    # 1x1 conv == channel matmul on the *pooled* pixels (pool and conv
    # commute); contraction over Cin, f32 accumulation.
    out = jnp.dot(w_ref[...], pooled.astype(w_ref.dtype),
                  preferred_element_type=jnp.float32)
    o_ref[0] = out.astype(o_ref.dtype)


def _choose_row_pairs(n, ho, wo, w, cin, cout, mxu_bytes, out_bytes, budget):
    """Number of output rows (`rp`) processed per grid step.

    Legality: rp must divide Ho, and the spatial chunk 2*rp*W must be a
    multiple of 512 elements (so both the chunk and its /4 pooled output stay
    lane-aligned) OR cover the whole image.
    """
    legal = [r for r in range(1, ho + 1)
             if ho % r == 0 and ((2 * r * w) % 512 == 0 or r == ho)]

    def block_bytes(r):
        L, Lp = 2 * r * w, r * wo
        return (2 * cin * L * 4                      # x block (dbl-buffered, f32)
                + 2 * cout * Lp * out_bytes          # out block (dbl-buffered)
                + 2 * L * Lp * mxu_bytes             # pool matrix
                + 2 * cout * cin * mxu_bytes         # conv weight
                + cin * L * (4 + mxu_bytes)          # y + its MXU-dtype copy
                + cin * Lp * (4 + mxu_bytes)         # pooled + its copy
                + cout * Lp * 4)                     # matmul result

    # smallest legal chunk that is already lane-dense on the pooled side
    rp = next((r for r in legal if r * wo >= 128), legal[-1])
    # shrink while the working set exceeds the VMEM budget
    while block_bytes(rp) > budget and legal.index(rp) > 0:
        rp = legal[legal.index(rp) - 1]
    # shrink to guarantee enough grid steps for pipelining and for sharding
    # the "parallel" axes across v7x's two TensorCores
    while n * (ho // rp) < 4 and legal.index(rp) > 0:
        rp = legal[legal.index(rp) - 1]
    return rp


@functools.partial(jax.jit, static_argnames=("mxu_dtype", "out_dtype"))
def transition_forward(x_nchw, gamma, beta, conv_w,
                       *, mxu_dtype=jnp.bfloat16, out_dtype=None):
    """x_nchw: (N, Cin, H, W); conv_w: (Cout, Cin, 1, 1). Returns NCHW."""
    N, Cin, H, W = x_nchw.shape
    Cout = conv_w.shape[0]
    assert H % 2 == 0 and W % 2 == 0, "AvgPool2d(2) path assumes even H, W"
    Ho, Wo = H // 2, W // 2
    HW, HoWo = H * W, Ho * Wo
    out_dtype = x_nchw.dtype if out_dtype is None else out_dtype

    xf = x_nchw.astype(jnp.float32)

    # ---- BatchNorm batch statistics: single fused pass, f32 accumulation ----
    mean = jnp.mean(xf, axis=(0, 2, 3))
    ex2 = jnp.mean(jnp.square(xf), axis=(0, 2, 3))
    var = jnp.maximum(ex2 - jnp.square(mean), 0.0)      # biased (PyTorch BN)
    inv = jax.lax.rsqrt(var + EPS)
    scale_v = gamma.astype(jnp.float32) * inv
    shift_v = beta.astype(jnp.float32) - mean * scale_v
    scale = scale_v.reshape(Cin, 1)
    shift = shift_v.reshape(Cin, 1)
    # TODO(synk): train-mode BatchNorm2d also updates running_mean/running_var
    # buffers; only the forward output is reproduced here.

    # ---- tiling / VMEM budget (generation-aware) ----
    mxu_bytes = jnp.dtype(mxu_dtype).itemsize
    out_bytes = jnp.dtype(out_dtype).itemsize
    vmem_cap = 64 << 20
    try:
        vmem_cap = int(getattr(pltpu.get_tpu_info(),
                               "vmem_capacity_bytes", vmem_cap))
    except Exception:
        pass
    # ~96 MiB on 128 MiB parts (v5e/v6e), ~48 MiB on v7x: leaves Mosaic headroom.
    vmem_limit = max(32 << 20, (min(vmem_cap, 128 << 20) * 3) // 4)

    rp = _choose_row_pairs(N, Ho, Wo, W, Cin, Cout, mxu_bytes, out_bytes,
                           budget=vmem_limit // 2)
    chunk = 2 * rp * W          # spatial elements per grid step (pairs of rows)
    lp = rp * Wo                # pooled elements per grid step
    n_chunks = Ho // rp

    # ---- constant pooling matrix for one chunk: A[r, q] = 0.25 iff pixel r
    #      of the chunk lies in 2x2 window q.  Same matrix for every chunk. --
    rows = jnp.arange(chunk)
    col = (rows // (2 * W)) * Wo + (rows % W) // 2
    pool_mat = (jax.nn.one_hot(col, lp, dtype=jnp.float32)
                * 0.25).astype(mxu_dtype)

    # ---- conv weight: (Cout, Cin, 1, 1) -> (Cout, Cin) ----
    w_mat = conv_w.reshape(Cout, Cin).astype(mxu_dtype)

    # ---- free reshape only: NCHW stays in its native layout ----
    x3 = xf.reshape(N, Cin, HW)

    flops = N * n_chunks * (2 * Cin * chunk * lp + 2 * Cout * Cin * lp)
    bytes_accessed = (N * Cin * HW * 4
                      + N * Cout * HoWo * out_bytes
                      + chunk * lp * mxu_bytes
                      + Cout * Cin * mxu_bytes
                      + 2 * Cin * 4)

    out_cm = pl.pallas_call(
        transition_kernel,
        out_shape=jax.ShapeDtypeStruct((N, Cout, HoWo), out_dtype),
        grid=(N, n_chunks),
        in_specs=[
            pl.BlockSpec((1, Cin, chunk), lambda n, c: (n, 0, c)),
            pl.BlockSpec((Cin, 1), lambda n, c: (0, 0)),
            pl.BlockSpec((Cin, 1), lambda n, c: (0, 0)),
            pl.BlockSpec((chunk, lp), lambda n, c: (0, 0)),
            pl.BlockSpec((Cout, Cin), lambda n, c: (0, 0)),
        ],
        out_specs=pl.BlockSpec((1, Cout, lp), lambda n, c: (n, 0, c)),
        compiler_params=pltpu.CompilerParams(
            dimension_semantics=("parallel", "parallel"),
            vmem_limit_bytes=vmem_limit),
        cost_estimate=pl.CostEstimate(
            flops=int(flops), transcendentals=0,
            bytes_accessed=int(bytes_accessed)),
    )(x3, scale, shift, pool_mat, w_mat)

    # channel-major result is already NCHW after a FREE reshape (no transpose)
    return out_cm.reshape(N, Cout, Ho, Wo)


# --------------------------------------------------------------------------
# Pure-JAX reference (mirrors PyTorch Transition.forward in train mode)
# --------------------------------------------------------------------------
def transition_reference(x, gamma, beta, conv_w):
    N, Cin, H, W = x.shape
    Cout = conv_w.shape[0]
    mean = x.mean(axis=(0, 2, 3))
    var = x.var(axis=(0, 2, 3))                          # biased
    xn = (x - mean[None, :, None, None]) * jax.lax.rsqrt(
        var + EPS)[None, :, None, None]
    h = jnp.maximum(xn * gamma[None, :, None, None] +
                    beta[None, :, None, None], 0.0)
    y = jnp.einsum('nchw,oc->nohw', h, conv_w.reshape(Cout, Cin),
                   precision=jax.lax.Precision.HIGHEST)
    return y.reshape(N, Cout, H // 2, 2, W // 2, 2).mean(axis=(3, 5))


if __name__ == "__main__":
    N, Cin, Cout, H, W = 2, 16, 8, 16, 16

    key = jax.random.PRNGKey(0)
    kx, kw = jax.random.split(key)
    x = jax.random.normal(kx, (N, Cin, H, W), dtype=jnp.float32)
    conv_w = (jax.random.normal(kw, (Cout, Cin, 1, 1), dtype=jnp.float32)
              * 0.1)
    gamma = jnp.ones((Cin,), jnp.float32)     # BatchNorm2d default init
    beta = jnp.zeros((Cin,), jnp.float32)

    ref = transition_reference(x, gamma, beta, conv_w)

    # f32 MXU path (tight check).
    out_f32 = jax.block_until_ready(
        transition_forward(x, gamma, beta, conv_w, mxu_dtype=jnp.float32))
    assert out_f32.shape == (N, Cout, H // 2, W // 2), out_f32.shape
    assert jnp.allclose(out_f32, ref, atol=5e-3, rtol=5e-3), (
        float(jnp.max(jnp.abs(out_f32 - ref))))

    # Default fast path: bf16 MXU operands (BN math + accumulation stay f32).
    out = jax.block_until_ready(transition_forward(x, gamma, beta, conv_w))
    assert out.shape == (N, Cout, H // 2, W // 2), out.shape
    assert jnp.allclose(out, ref, atol=2e-2, rtol=2e-2), (
        float(jnp.max(jnp.abs(out - ref))))

    print("KERNEL_OK")
</pallas_src>

<mosaic_0001>
module attributes {stable_mosaic.version = 11 : i64} {
  func.func @transition_kernel(%arg0: i32, %arg1: i32, %arg2: memref<1x16x256xf32, #tpu.memory_space<vmem>>, %arg3: memref<16x1xf32, #tpu.memory_space<vmem>>, %arg4: memref<16x1xf32, #tpu.memory_space<vmem>>, %arg5: memref<256x64xf32, #tpu.memory_space<vmem>>, %arg6: memref<8x16xf32, #tpu.memory_space<vmem>>, %arg7: memref<1x8x64xf32, #tpu.memory_space<vmem>>) attributes {dimension_semantics = [#tpu.dimension_semantics<parallel>, #tpu.dimension_semantics<parallel>], iteration_bounds = array<i64: 2, 1>, scalar_prefetch = 0 : i64, scratch_operands = 0 : i64, tpu.core_type = #tpu.core_type<tc>, window_params = [{transform_indices = @transform_0, window_bounds = array<i64: 1, 16, 256>}, {pipeline_mode = #tpu.pipeline_mode<synchronous>, transform_indices = @transform_1, window_bounds = array<i64: 16, 1>}, {pipeline_mode = #tpu.pipeline_mode<synchronous>, transform_indices = @transform_2, window_bounds = array<i64: 16, 1>}, {pipeline_mode = #tpu.pipeline_mode<synchronous>, transform_indices = @transform_3, window_bounds = array<i64: 256, 64>}, {pipeline_mode = #tpu.pipeline_mode<synchronous>, transform_indices = @transform_4, window_bounds = array<i64: 8, 16>}, {transform_indices = @transform_5, window_bounds = array<i64: 1, 8, 64>}]} {
    %c0 = arith.constant 0 : index
    %c0_0 = arith.constant 0 : index
    %c0_1 = arith.constant 0 : index
    %0 = vector.load %arg2[%c0, %c0_0, %c0_1] : memref<1x16x256xf32, #tpu.memory_space<vmem>>, vector<1x16x256xf32>
    %1 = vector.shape_cast %0 : vector<1x16x256xf32> to vector<16x256xf32>
    %c0_2 = arith.constant 0 : index
    %c0_3 = arith.constant 0 : index
    %2 = vector.load %arg3[%c0_2, %c0_3] : memref<16x1xf32, #tpu.memory_space<vmem>>, vector<16x1xf32>
    %3 = vector.broadcast %2 : vector<16x1xf32> to vector<16x256xf32>
    %4 = arith.mulf %1, %3 : vector<16x256xf32>
    %c0_4 = arith.constant 0 : index
    %c0_5 = arith.constant 0 : index
    %5 = vector.load %arg4[%c0_4, %c0_5] : memref<16x1xf32, #tpu.memory_space<vmem>>, vector<16x1xf32>
    %6 = vector.broadcast %5 : vector<16x1xf32> to vector<16x256xf32>
    %7 = arith.addf %4, %6 : vector<16x256xf32>
    %cst = arith.constant 0.000000e+00 : f32
    %8 = vector.broadcast %cst : f32 to vector<16x256xf32>
    %9 = arith.maximumf %7, %8 : vector<16x256xf32>
    %c0_6 = arith.constant 0 : index
    %c0_7 = arith.constant 0 : index
    %10 = vector.load %arg5[%c0_6, %c0_7] : memref<256x64xf32, #tpu.memory_space<vmem>>, vector<256x64xf32>
    %cst_8 = arith.constant dense<0.000000e+00> : vector<16x64xf32>
    %11 = tpu.matmul %9, %10, %cst_8 {dimension_numbers = #tpu.dot_dimension_numbers<[1], [0], [0], [1], [0, 0, 1, 1], [], []>} : vector<16x256xf32>, vector<256x64xf32>, vector<16x64xf32> -> vector<16x64xf32>
    %c0_9 = arith.constant 0 : index
    %c0_10 = arith.constant 0 : index
    %12 = vector.load %arg6[%c0_9, %c0_10] : memref<8x16xf32, #tpu.memory_space<vmem>>, vector<8x16xf32>
    %cst_11 = arith.constant dense<0.000000e+00> : vector<8x64xf32>
    %13 = tpu.matmul %12, %11, %cst_11 {dimension_numbers = #tpu.dot_dimension_numbers<[1], [0], [0], [1], [0, 0, 1, 1], [], []>} : vector<8x16xf32>, vector<16x64xf32>, vector<8x64xf32> -> vector<8x64xf32>
    %c0_12 = arith.constant 0 : index
    %c0_13 = arith.constant 0 : index
    %c0_14 = arith.constant 0 : index
    %14 = vector.load %arg7[%c0_12, %c0_13, %c0_14] : memref<1x8x64xf32, #tpu.memory_space<vmem>>, vector<1x8x64xf32>
    %15 = vector.shape_cast %14 : vector<1x8x64xf32> to vector<8x64xf32>
    %16 = vector.shape_cast %13 : vector<8x64xf32> to vector<1x8x64xf32>
    tpu.vector_store %arg7[%c0_12, %c0_13, %c0_14], %16 {strides = array<i32>} : memref<1x8x64xf32, #tpu.memory_space<vmem>>, vector<1x8x64xf32>,
    return
  }
  func.func @transform_0(%arg0: i32, %arg1: i32) -> (i32, i32, i32) {
    %c0_i32 = arith.constant 0 : i32
    %c0_i32_0 = arith.constant 0 : i32
    return %arg0, %c0_i32, %arg1 : i32, i32, i32
  }
  func.func @transform_1(%arg0: i32, %arg1: i32) -> (i32, i32) {
    %c0_i32 = arith.constant 0 : i32
    %c0_i32_0 = arith.constant 0 : i32
    %c0_i32_1 = arith.constant 0 : i32
    return %c0_i32, %c0_i32_0 : i32, i32
  }
  func.func @transform_2(%arg0: i32, %arg1: i32) -> (i32, i32) {
    %c0_i32 = arith.constant 0 : i32
    %c0_i32_0 = arith.constant 0 : i32
    %c0_i32_1 = arith.constant 0 : i32
    return %c0_i32, %c0_i32_0 : i32, i32
  }
  func.func @transform_3(%arg0: i32, %arg1: i32) -> (i32, i32) {
    %c0_i32 = arith.constant 0 : i32
    %c0_i32_0 = arith.constant 0 : i32
    %c0_i32_1 = arith.constant 0 : i32
    return %c0_i32, %c0_i32_0 : i32, i32
  }
  func.func @transform_4(%arg0: i32, %arg1: i32) -> (i32, i32) {
    %c0_i32 = arith.constant 0 : i32
    %c0_i32_0 = arith.constant 0 : i32
    %c0_i32_1 = arith.constant 0 : i32
    return %c0_i32, %c0_i32_0 : i32, i32
  }
  func.func @transform_5(%arg0: i32, %arg1: i32) -> (i32, i32, i32) {
    %c0_i32 = arith.constant 0 : i32
    %c0_i32_0 = arith.constant 0 : i32
    return %arg0, %c0_i32, %arg1 : i32, i32, i32
  }
}

</mosaic_0001>

<llo_original>
// kernel: transition_forward.1
$region0: #{transition_forward.1}
  #allocation0 [shape = 'u32[]', space=smem, size = 0x4, offset = 0x4, fixed_abs, tag = 'smem constant byte address 0x4 - core index']
  #allocation1 [shape = 'u32[72,128]{1,0:T(1,128)}', space=vmem, size = 0x9000, scoped, tag = 'internal scratch']
  %s0 = inlined_call_operand.vmem [shape: f32[2,16,256], index: 0, kind: input, shape index: {}]
  %s1 = inlined_call_operand.vmem [shape: f32[16,1], index: 1, kind: input, shape index: {}]
  %s2 = inlined_call_operand.vmem [shape: f32[16,1], index: 2, kind: input, shape index: {}]
  %s3 = inlined_call_operand.vmem [shape: f32[256,64], index: 3, kind: input, shape index: {}]
  %s4 = inlined_call_operand.vmem [shape: f32[8,16], index: 4, kind: input, shape index: {}]
  %s5 = inlined_call_operand.vmem [shape: f32[2,8,64], index: 5, kind: output, shape index: {}]
  %s6 = sld [smem:[#allocation0]]
  $region53: #{transition_forward.1} parent=0
    _
  %s8 = ssub.s32 1, %s6
  %s9 = scalar_select 0, %s8, %s6
  loop: start=0, step=1, limit=4
  $region2: #{transition_forward.1} parent=0 // loop_pre_header
    _
  $region3: #{transition_forward.1} parent=0 // loop_header
    %s11 = sphi 0, %s15
    %p12 = scmp.ge.s32.totalorder %s11, 4
    %s18 = sphi 0, %s30
    %s19 = sphi 0, %s26
    %s20 = sphi 0, %s18
    %s21 = sphi 0, %s19
    %s22 = sphi 0, %s20
    %s23 = sphi 0, %s21
    %s35 = sphi 0, %s37
    %s38 = sphi 0, %s35
    %s39 = sphi 0, %s38
    %s55 = sphi 0, %s39
    %s59 = sphi 0, %s59
    %s61 = sphi 0, %s59
    %s62 = sphi 0, %s61
    %s76 = sphi 0, %s62
    %s80 = sphi 0, %s80
    %s82 = sphi 0, %s80
    %s83 = sphi 0, %s82
    %s97 = sphi 0, %s83
    %s101 = sphi 0, %s101
    %s103 = sphi 0, %s101
    %s104 = sphi 0, %s103
    %s118 = sphi 0, %s104
    %s122 = sphi 0, %s122
    %s124 = sphi 0, %s122
    %s125 = sphi 0, %s124
    %s139 = sphi 0, %s125
    %s147 = sphi 0, %s149
    %s150 = sphi 0, %s147
    %s151 = sphi 0, %s150
    %s167 = sphi 0, %s151
  $region4: #{transition_forward.1} parent=0 // loop_header_branch
    %14 = sbr.rel (%p12) target = $region8
  $region5: #{transition_forward.1} parent=0 // loop_body
    %s16 = ssub.s32 %s11, 1
    %s17 = ssub.s32 %s11, 2
    %s24 = sadd.s32 1, %s19
    %p25 = scmp.ge.s32.totalorder %s24, 1
    %s26 = scalar_select %p25, 0, %s24
    %s27 = sadd.s32 1, %s18
    %s28 = scalar_select %p25, %s27, %s18
    %p29 = scmp.ge.s32.totalorder %s28, 2
    %s30 = scalar_select %p29, 0, %s28
    %s31 = ssub.s32 %s18, %s30
    %s32 = ssub.s32 %s19, %s26
    %s33 = sor.u32 %s31, %s32
    %p34 = scmp.eq.s32.totalorder %s33, 0
    %s36 = sadd.s32 %s35, 1
    %s37 = scalar_select %p34, %s35, %s36
    %p40 = pneg %p34
    %p41 = scmp.eq.s32.totalorder %s11, 1
    %p42 = por %p40, %p41
    %p43 = scmp.ne.s32.totalorder %s35, %s38
    %p44 = scmp.eq.s32.totalorder %s11, 0
    %p45 = por %p43, %p44
    %p46 = scmp.ne.s32.totalorder %s35, %s38
    %p47 = scmp.eq.s32.totalorder %s16, 1
    %p48 = por %p46, %p47
    %p49 = scmp.ne.s32.totalorder %s38, %s39
    %p50 = scmp.eq.s32.totalorder %s16, 0
    %p51 = por %p49, %p50
    %p52 = scmp.ne.s32.totalorder %s38, %s39
    %p53 = scmp.eq.s32.totalorder %s17, 1
    %p54 = por %p52, %p53
    %p56 = scmp.ne.s32.totalorder %s39, %s55
    %p57 = scmp.eq.s32.totalorder %s17, 0
    %p58 = por %p56, %p57
    %s60 = sadd.s32 %s59, 1
    %p63 = scmp.eq.s32.totalorder %s11, 1
    %p64 = scmp.ne.s32.totalorder %s59, %s61
    %p65 = scmp.eq.s32.totalorder %s11, 0
    %p66 = por %p64, %p65
    %p67 = scmp.ne.s32.totalorder %s59, %s61
    %p68 = scmp.eq.s32.totalorder %s16, 1
    %p69 = por %p67, %p68
    %p70 = scmp.ne.s32.totalorder %s61, %s62
    %p71 = scmp.eq.s32.totalorder %s16, 0
    %p72 = por %p70, %p71
    %p73 = scmp.ne.s32.totalorder %s61, %s62
    %p74 = scmp.eq.s32.totalorder %s17, 1
    %p75 = por %p73, %p74
    %p77 = scmp.ne.s32.totalorder %s62, %s76
    %p78 = scmp.eq.s32.totalorder %s17, 0
    %p79 = por %p77, %p78
    %s81 = sadd.s32 %s80, 1
    %p84 = scmp.eq.s32.totalorder %s11, 1
    %p85 = scmp.ne.s32.totalorder %s80, %s82
    %p86 = scmp.eq.s32.totalorder %s11, 0
    %p87 = por %p85, %p86
    %p88 = scmp.ne.s32.totalorder %s80, %s82
    %p89 = scmp.eq.s32.totalorder %s16, 1
    %p90 = por %p88, %p89
    %p91 = scmp.ne.s32.totalorder %s82, %s83
    %p92 = scmp.eq.s32.totalorder %s16, 0
    %p93 = por %p91, %p92
    %p94 = scmp.ne.s32.totalorder %s82, %s83
    %p95 = scmp.eq.s32.totalorder %s17, 1
    %p96 = por %p94, %p95
    %p98 = scmp.ne.s32.totalorder %s83, %s97
    %p99 = scmp.eq.s32.totalorder %s17, 0
    %p100 = por %p98, %p99
    %s102 = sadd.s32 %s101, 1
    %p105 = scmp.eq.s32.totalorder %s11, 1
    %p106 = scmp.ne.s32.totalorder %s101, %s103
    %p107 = scmp.eq.s32.totalorder %s11, 0
    %p108 = por %p106, %p107
    %p109 = scmp.ne.s32.totalorder %s101, %s103
    %p110 = scmp.eq.s32.totalorder %s16, 1
    %p111 = por %p109, %p110
    %p112 = scmp.ne.s32.totalorder %s103, %s104
    %p113 = scmp.eq.s32.totalorder %s16, 0
    %p114 = por %p112, %p113
    %p115 = scmp.ne.s32.totalorder %s103, %s104
    %p116 = scmp.eq.s32.totalorder %s17, 1
    %p117 = por %p115, %p116
    %p119 = scmp.ne.s32.totalorder %s104, %s118
    %p120 = scmp.eq.s32.totalorder %s17, 0
    %p121 = por %p119, %p120
    %s123 = sadd.s32 %s122, 1
    %p126 = scmp.eq.s32.totalorder %s11, 1
    %p127 = scmp.ne.s32.totalorder %s122, %s124
    %p128 = scmp.eq.s32.totalorder %s11, 0
    %p129 = por %p127, %p128
    %p130 = scmp.ne.s32.totalorder %s122, %s124
    %p131 = scmp.eq.s32.totalorder %s16, 1
    %p132 = por %p130, %p131
    %p133 = scmp.ne.s32.totalorder %s124, %s125
    %p134 = scmp.eq.s32.totalorder %s16, 0
    %p135 = por %p133, %p134
    %p136 = scmp.ne.s32.totalorder %s124, %s125
    %p137 = scmp.eq.s32.totalorder %s17, 1
    %p138 = por %p136, %p137
    %p140 = scmp.ne.s32.totalorder %s125, %s139
    %p141 = scmp.eq.s32.totalorder %s17, 0
    %p142 = por %p140, %p141
    %s143 = ssub.s32 %s18, %s30
    %s144 = ssub.s32 %s19, %s26
    %s145 = sor.u32 %s143, %s144
    %p146 = scmp.eq.s32.totalorder %s145, 0
    %s148 = sadd.s32 %s147, 1
    %s149 = scalar_select %p146, %s147, %s148
    %p152 = pneg %p146
    %p153 = scmp.eq.s32.totalorder %s11, 1
    %p154 = por %p152, %p153
    %p155 = scmp.ne.s32.totalorder %s147, %s150
    %p156 = scmp.eq.s32.totalorder %s11, 0
    %p157 = por %p155, %p156
    %p158 = scmp.ne.s32.totalorder %s147, %s150
    %p159 = scmp.eq.s32.totalorder %s16, 1
    %p160 = por %p158, %p159
    %p161 = scmp.ne.s32.totalorder %s150, %s151
    %p162 = scmp.eq.s32.totalorder %s16, 0
    %p163 = por %p161, %p162
    %p164 = scmp.ne.s32.totalorder %s150, %s151
    %p165 = scmp.eq.s32.totalorder %s17, 1
    %p166 = por %p164, %p165
    %p168 = scmp.ne.s32.totalorder %s151, %s167
    %p169 = scmp.eq.s32.totalorder %s17, 0
    %p170 = por %p168, %p169
    %p171 = scmp.le.s32.totalorder 1, %s11
    %p172 = scmp.lt.s32.totalorder %s11, 3
    %p173 = pnand %p171, %p172
    %p174 = pneg %p173
    // Predicated region
    $region9: #{transition_forward.1} parent=5 // pred_check
      _
    $region10: #{transition_forward.1} parent=5 // pred_check_branch
      %176 = sbr.rel (%p173) target = $region12
    $region11: #{transition_forward.1} parent=5 // pred_region
      %s177 = ssub.s32 %s11, 1
      // Predicated region
      $region13: #{transition_forward.1} parent=11 // pred_check
        %p178 = pneg %p72
      $region14: #{transition_forward.1} parent=11 // pred_check_branch
        %180 = sbr.rel (%p178) target = $region16
      $region15: #{transition_forward.1} parent=11 // pred_region
        _
      $region16: #{transition_forward.1} parent=11 // pred_fallthru
        _
      // Predicated region
      $region17: #{transition_forward.1} parent=11 // pred_check
        %p181 = pneg %p93
      $region18: #{transition_forward.1} parent=11 // pred_check_branch
        %183 = sbr.rel (%p181) target = $region20
      $region19: #{transition_forward.1} parent=11 // pred_region
        _
      $region20: #{transition_forward.1} parent=11 // pred_fallthru
        _
      // Predicated region
      $region21: #{transition_forward.1} parent=11 // pred_check
        %p184 = pneg %p114
      $region22: #{transition_forward.1} parent=11 // pred_check_branch
        %186 = sbr.rel (%p184) target = $region24
      $region23: #{transition_forward.1} parent=11 // pred_region
        _
      $region24: #{transition_forward.1} parent=11 // pred_fallthru
        _
      // Predicated region
      $region25: #{transition_forward.1} parent=11 // pred_check
        %p187 = pneg %p135
      $region26: #{transition_forward.1} parent=11 // pred_check_branch
        %189 = sbr.rel (%p187) target = $region28
      $region27: #{transition_forward.1} parent=11 // pred_region
        _
      $region28: #{transition_forward.1} parent=11 // pred_fallthru
        _
    $region12: #{transition_forward.1} parent=5 // pred_fallthru
      _
    %p190 = scmp.lt.s32.totalorder %s11, 2
    // Predicated region
    $region29: #{transition_forward.1} parent=5 // pred_check
      %p191 = pneg %p190
    $region30: #{transition_forward.1} parent=5 // pred_check_branch
      %193 = sbr.rel (%p191) target = $region32
    $region31: #{transition_forward.1} parent=5 // pred_region
      // Predicated region
      $region33: #{transition_forward.1} parent=31 // pred_check
        %p194 = pneg %p45
      $region34: #{transition_forward.1} parent=31 // pred_check_branch
        %196 = sbr.rel (%p194) target = $region36
      $region35: #{transition_forward.1} parent=31 // pred_region
        %s197 = smul.u32 2, %s19
        %p198 = scmp.lt.s32.totalorder %s18, 1
        %s199 = scalar_select %p198, %s18, 1
        %p200 = scmp.lt.s32.totalorder %s197, 1
        %s201 = scalar_select %p200, %s197, 1
        %s202 = smul.addr %s199, 4
        %s203 = sadd.s32 %s201, %s202
        %s204 = smul.addr %s203, 8
        %s205 = scalar_lea.vmem %s0, %s204
        %s206 = smul.u32 2, %s19
      $region36: #{transition_forward.1} parent=31 // pred_fallthru
        _
    $region32: #{transition_forward.1} parent=5 // pred_fallthru
      _
    %p207 = scmp.le.s32.totalorder 1, %s11
    %p208 = scmp.lt.s32.totalorder %s11, 3
    %p209 = pnand %p207, %p208
    %p210 = pneg %p209
    // Predicated region
    $region37: #{transition_forward.1} parent=5 // pred_check
      _
    $region38: #{transition_forward.1} parent=5 // pred_check_branch
      %212 = sbr.rel (%p209) target = $region40
    $region39: #{transition_forward.1} parent=5 // pred_region
      %s213 = ssub.s32 %s11, 1
      %s214 = smul.u32 2, %s21
      %p215 = scmp.lt.s32.totalorder %s20, 1
      %s216 = scalar_select %p215, %s20, 1
      %p217 = scmp.lt.s32.totalorder %s214, 1
      %s218 = scalar_select %p217, %s214, 1
      %s219 = smul.addr %s216, 4
      %s220 = sadd.s32 %s218, %s219
      %s221 = smul.addr %s220, 8
      %s222 = scalar_lea.vmem %s0, %s221
      %p223 = pneg %p51
      %p224 = pneg %p48
      %p225 = pneg %p72
      %p226 = pneg %p69
      %p227 = pneg %p93
      %p228 = pneg %p90
      %p229 = pneg %p114
      %p230 = pneg %p111
      %p231 = pneg %p135
      %p232 = pneg %p132
      %p233 = pneg %p163
      %p234 = pneg %p160
      %p235 = scmp.lt.s32.totalorder %s20, 1
      %s236 = scalar_select %p235, %s20, 1
      %p237 = scmp.lt.s32.totalorder %s21, 0
      %s238 = scalar_select %p237, %s21, 0
      %s239 = sadd.s32 %s238, %s236
      %s240 = smul.addr %s239, 8
      %s241 = scalar_lea.vmem %s5, %s240
      %s242 = smul.u32 2, %s21
      %p243 = scmp.lt.s32.totalorder %s20, 1
      %s244 = scalar_select %p243, %s20, 1
      %p245 = scmp.lt.s32.totalorder %s242, 1
      %s246 = scalar_select %p245, %s242, 1
      %s247 = smul.addr %s244, 4
      %s248 = sadd.s32 %s246, %s247
      %s249 = smul.addr %s248, 8
      %s250 = scalar_lea.vmem %s0, %s249
      %s251 = smul.u32 2, %s21
      %p252 = scmp.lt.s32.totalorder %s20, 1
      %s253 = scalar_select %p252, %s20, 1
      %p254 = scmp.lt.s32.totalorder %s21, 0
      %s255 = scalar_select %p254, %s21, 0
      %s256 = sadd.s32 %s255, %s253
      %s257 = smul.addr %s256, 8
      %s258 = scalar_lea.vmem %s5, %s257
      %v259 = vld [vmem:[%s250] sm:$0xff]
      %v260 = vld [vmem:[%s250 + $0x8] sm:$0xff]
      %v261 = vld [vmem:[%s250 + $0x10] sm:$0xff]
      %v262 = vld [vmem:[%s250 + $0x18] sm:$0xff]
      %v263 = vld [vmem:[%s1] sm:$0xff]
      %v264 = vld [vmem:[%s1 + $0x8] sm:$0xff]
      %266 = vset.pattern.permute.xlu0 0
      %267 = vperm.xlu0 %266, %v263
      %v268 = vpop.permute.xlu0 %267
      %271 = vset.pattern.permute.xlu0 0
      %272 = vperm.xlu0 %271, %v264
      %v273 = vpop.permute.xlu0 %272
      %v275 = vmul.f32 %v259, %v268
      %v276 = vmul.f32 %v260, %v268
      %v277 = vmul.f32 %v261, %v273
      %v278 = vmul.f32 %v262, %v273
      %v279 = vld [vmem:[%s2] sm:$0xff]
      %v280 = vld [vmem:[%s2 + $0x8] sm:$0xff]
      %282 = vset.pattern.permute.xlu0 0
      %283 = vperm.xlu0 %282, %v279
      %v284 = vpop.permute.xlu0 %283
      %287 = vset.pattern.permute.xlu0 0
      %288 = vperm.xlu0 %287, %v280
      %v289 = vpop.permute.xlu0 %288
      %v291 = vadd.f32 %v275, %v284
      %v292 = vadd.f32 %v276, %v284
      %v293 = vadd.f32 %v277, %v289
      %v294 = vadd.f32 %v278, %v289
      %v295 = vmax.f32 %v291, 0.0
      %v296 = vmax.f32 %v292, 0.0
      %v297 = vmax.f32 %v293, 0.0
      %v298 = vmax.f32 %v294, 0.0
      %v299 = vld [vmem:[%s3] sm:$0xff]
      %v300 = vld [vmem:[%s3 + $0x8] sm:$0xff]
      %v301 = vld [vmem:[%s3 + $0x10] sm:$0xff]
      %v302 = vld [vmem:[%s3 + $0x18] sm:$0xff]
      %v303 = vld [vmem:[%s3 + $0x20] sm:$0xff]
      %v304 = vld [vmem:[%s3 + $0x28] sm:$0xff]
      %v305 = vld [vmem:[%s3 + $0x30] sm:$0xff]
      %v306 = vld [vmem:[%s3 + $0x38] sm:$0xff]
      %v307 = vld [vmem:[%s3 + $0x40] sm:$0xff]
      %v308 = vld [vmem:[%s3 + $0x48] sm:$0xff]
      %v309 = vld [vmem:[%s3 + $0x50] sm:$0xff]
      %v310 = vld [vmem:[%s3 + $0x58] sm:$0xff]
      %v311 = vld [vmem:[%s3 + $0x60] sm:$0xff]
      %v312 = vld [vmem:[%s3 + $0x68] sm:$0xff]
      %v313 = vld [vmem:[%s3 + $0x70] sm:$0xff]
      %v314 = vld [vmem:[%s3 + $0x78] sm:$0xff]
      %v315 = vld [vmem:[%s3 + $0x80] sm:$0xff]
      %v316 = vld [vmem:[%s3 + $0x88] sm:$0xff]
      %v317 = vld [vmem:[%s3 + $0x90] sm:$0xff]
      %v318 = vld [vmem:[%s3 + $0x98] sm:$0xff]
      %v319 = vld [vmem:[%s3 + $0xa0] sm:$0xff]
      %v320 = vld [vmem:[%s3 + $0xa8] sm:$0xff]
      %v321 = vld [vmem:[%s3 + $0xb0] sm:$0xff]
      %v322 = vld [vmem:[%s3 + $0xb8] sm:$0xff]
      %v323 = vld [vmem:[%s3 + $0xc0] sm:$0xff]
      %v324 = vld [vmem:[%s3 + $0xc8] sm:$0xff]
      %v325 = vld [vmem:[%s3 + $0xd0] sm:$0xff]
      %v326 = vld [vmem:[%s3 + $0xd8] sm:$0xff]
      %v327 = vld [vmem:[%s3 + $0xe0] sm:$0xff]
      %v328 = vld [vmem:[%s3 + $0xe8] sm:$0xff]
      %v329 = vld [vmem:[%s3 + $0xf0] sm:$0xff]
      %v330 = vld [vmem:[%s3 + $0xf8] sm:$0xff]
      %331 = vmatpush.msra.mxu0 %v314
      %332 = vmatpush.msra.mxu0 %v313
      %333 = vmatpush.msra.mxu0 %v312
      %334 = vmatpush.msra.mxu0 %v311
      %335 = vmatpush.msra.mxu0 %v310
      %336 = vmatpush.msra.mxu0 %v309
      %337 = vmatpush.msra.mxu0 %v308
      %338 = vmatpush.msra.mxu0 %v307
      %339 = vmatpush.msra.mxu0 %v306
      %340 = vmatpush.msra.mxu0 %v305
      %341 = vmatpush.msra.mxu0 %v304
      %342 = vmatpush.msra.mxu0 %v303
      %343 = vmatpush.msra.mxu0 %v302
      %344 = vmatpush.msra.mxu0 %v301
      %345 = vmatpush.msra.mxu0 %v300
      %346 = vmatpush.msra.mxu0 %v299
      %347 = vmatmul.f32.gmra.mxu0 %v295
      %v348 = vpop.f32.mrf.mxu0
      %v349 = vadd.f32 0.0, %v348
      %350 = vmatmul.f32.gmra.mxu0 %v297
      %v351 = vpop.f32.mrf.mxu0
      %v352 = vadd.f32 0.0, %v351
      %353 = vdwg.mxu0
      %354 = vmatpush.msra.mxu0 %v330
      %355 = vmatpush.msra.mxu0 %v329
      %356 = vmatpush.msra.mxu0 %v328
      %357 = vmatpush.msra.mxu0 %v327
      %358 = vmatpush.msra.mxu0 %v326
      %359 = vmatpush.msra.mxu0 %v325
      %360 = vmatpush.msra.mxu0 %v324
      %361 = vmatpush.msra.mxu0 %v323
      %362 = vmatpush.msra.mxu0 %v322
      %363 = vmatpush.msra.mxu0 %v321
      %364 = vmatpush.msra.mxu0 %v320
      %365 = vmatpush.msra.mxu0 %v319
      %366 = vmatpush.msra.mxu0 %v318
      %367 = vmatpush.msra.mxu0 %v317
      %368 = vmatpush.msra.mxu0 %v316
      %369 = vmatpush.msra.mxu0 %v315
      %370 = vmatmul.f32.gmra.mxu0 %v296
      %v371 = vpop.f32.mrf.mxu0
      %v372 = vadd.f32 %v349, %v371
      %373 = vmatmul.f32.gmra.mxu0 %v298
      %v374 = vpop.f32.mrf.mxu0
      %v375 = vadd.f32 %v352, %v374
      %376 = vdwg.mxu0
      %v377 = vld [vmem:[%s4] sm:$0xff]
      %vm378 = vcmask 130048
      %v380 = vsel %vm378, %v377, 0
      %382 = vmatpush.msra.mxu0 0.0
      %383 = vmatpush.msra.mxu0 0.0
      %384 = vmatpush.msra.mxu0 0.0
      %385 = vmatpush.msra.mxu0 0.0
      %386 = vmatpush.msra.mxu0 0.0
      %387 = vmatpush.msra.mxu0 0.0
      %388 = vmatpush.msra.mxu0 0.0
      %389 = vmatpush.msra.mxu0 0.0
      %390 = vmatpush.msra.mxu0 0.0
      %391 = vmatpush.msra.mxu0 0.0
      %392 = vmatpush.msra.mxu0 0.0
      %393 = vmatpush.msra.mxu0 0.0
      %394 = vmatpush.msra.mxu0 0.0
      %395 = vmatpush.msra.mxu0 0.0
      %396 = vmatpush.msra.mxu0 %v375
      %397 = vmatpush.msra.mxu0 %v372
      %398 = vmatmul.f32.gmra.mxu0 %v380
      %v399 = vpop.f32.mrf.mxu0
      %v400 = vadd.f32 0.0, %v399
      %401 = vdwg.mxu0
      %vm402 = vcmask 523264
      %403 = vst.msk [vmem:[%s258] sm:$0xff] %vm402, %v400
      %p404 = scmp.lt.s32.totalorder %s20, 1
      %s405 = scalar_select %p404, %s20, 1
      %p406 = scmp.lt.s32.totalorder %s21, 0
      %s407 = scalar_select %p406, %s21, 0
      %s408 = sadd.s32 %s407, %s405
      %s409 = smul.addr %s408, 8
      %s410 = scalar_lea.vmem %s5, %s409
      // Predicated region
      $region41: #{transition_forward.1} parent=39 // pred_check
        %p411 = pneg %p160
      $region42: #{transition_forward.1} parent=39 // pred_check_branch
        %413 = sbr.rel (%p411) target = $region44
      $region43: #{transition_forward.1} parent=39 // pred_region
        _
      $region44: #{transition_forward.1} parent=39 // pred_fallthru
        _
    $region40: #{transition_forward.1} parent=5 // pred_fallthru
      _
    %p414 = scmp.le.s32.totalorder 2, %s11
    // Predicated region
    $region45: #{transition_forward.1} parent=5 // pred_check
      %p415 = pneg %p414
    $region46: #{transition_forward.1} parent=5 // pred_check_branch
      %417 = sbr.rel (%p415) target = $region48
    $region47: #{transition_forward.1} parent=5 // pred_region
      %s418 = ssub.s32 %s11, 2
      // Predicated region
      $region49: #{transition_forward.1} parent=47 // pred_check
        %p419 = pneg %p166
      $region50: #{transition_forward.1} parent=47 // pred_check_branch
        %421 = sbr.rel (%p419) target = $region52
      $region51: #{transition_forward.1} parent=47 // pred_region
        %p422 = scmp.lt.s32.totalorder %s22, 1
        %s423 = scalar_select %p422, %s22, 1
        %p424 = scmp.lt.s32.totalorder %s23, 0
        %s425 = scalar_select %p424, %s23, 0
        %s426 = sadd.s32 %s425, %s423
        %s427 = smul.addr %s426, 8
        %s428 = scalar_lea.vmem %s5, %s427
      $region52: #{transition_forward.1} parent=47 // pred_fallthru
        _
    $region48: #{transition_forward.1} parent=5 // pred_fallthru
      _
  $region6: #{transition_forward.1} parent=0 // loop_footer
    %s15 = sadd.s32 1, %s11
  $region7: #{transition_forward.1} parent=0 // loop_footer_branch
    %10 = sbr.rel target = $region3
  $region8: #{transition_forward.1} parent=0 // loop_exit
    _

</llo_original>
